<compile_context>
chip_gen: v5e
topology: v5e:2x2
jax: 0.10.0
libtpu: 0.0.40
codegen_flags: <defaults>
</compile_context>

<pallas_src>
import functools

import jax
import jax.numpy as jnp
from jax.experimental import pallas as pl
from jax.experimental.pallas import tpu as pltpu

LANES = 128
# Per-step (logits + gt) block budget.  Double-buffered ≈ 12 MiB, leaving
# ~20 MiB of the 32 MiB scoped VMEM for elementwise intermediates on v7x.
BLOCK_BYTE_BUDGET = 6 * 1024 * 1024


def _fscore_kernel(logits_ref, gt_ref, part_ref, *, total_rows):
    # logits_ref: (1, C, TR, 128) in VMEM (input dtype, raw logits)
    # gt_ref:     (1, TR, 128)    in VMEM (labels, any integer/float dtype)
    # part_ref:   (1, 1, 3, 8, 128) f32 VMEM output block (per-step partials)
    r = pl.program_id(1)
    C = logits_ref.shape[1]
    TR = logits_ref.shape[2]

    # argmax over channels directly on the logits: softmax is monotone per
    # pixel, so the argmax (and hence the torch module's result) is unchanged.
    # Strict '>' resolves ties to the lowest channel, matching jnp.argmax.
    if C == 2:
        pred = (logits_ref[0, 1] > logits_ref[0, 0]).astype(jnp.float32)
    else:
        best = logits_ref[0, 0]
        pred = jnp.zeros(best.shape, jnp.float32)
        for c in range(1, C):
            lc = logits_ref[0, c]
            better = lc > best
            best = jnp.where(better, lc, best)
            pred = jnp.where(better, jnp.float32(c), pred)  # scalar splat

    gt = gt_ref[0].astype(jnp.float32)

    # Ragged last row-tile handled in-kernel (no wrapper pad to a tile
    # multiple): rows past `total_rows` hold garbage from the partial block
    # DMA and are zeroed before they can touch the sums.
    if total_rows % TR != 0:
        row = jax.lax.broadcasted_iota(jnp.int32, (TR, LANES), 0)
        live = row < (total_rows - r * TR)
        pred = jnp.where(live, pred, 0.0)
        gt = jnp.where(live, gt, 0.0)

    # Fold all rows of the tile into a single (8,128) vreg tile per statistic.
    # The reshape splits the sublane axis at its native 8-row tiling (no
    # relayout); the sum over the leading axis is pure VALU vreg adds.
    def fold(x):
        return jnp.sum(x.reshape(TR // 8, 8, LANES), axis=0)

    part_ref[0, 0, 0] = fold(gt * pred)   # Σ gt·pred  (= tp)
    part_ref[0, 0, 1] = fold(pred)        # Σ pred     (fp = Σpred − tp)
    part_ref[0, 0, 2] = fold(gt)          # Σ gt       (fn = Σgt  − tp)


def fscore(y_pred, y_gt):
    """y_pred: (N, C, H, W) logits; y_gt: (N, H, W) {0,1} labels. Returns scalar f1."""
    N, C, H, W = y_pred.shape
    P = H * W
    r0 = (P + LANES - 1) // LANES          # 128-lane rows per image
    p128 = r0 * LANES

    # Contiguous (free) reshapes only; pad only the sub-128 lane remainder.
    logits = y_pred.reshape(N, C, P)
    gt = y_gt.reshape(N, P)
    if p128 != P:
        # Zero logits -> pred = 0 and zero gt -> padded pixels contribute 0.
        logits = jnp.pad(logits, ((0, 0), (0, 0), (0, p128 - P)))
        gt = jnp.pad(gt, ((0, 0), (0, p128 - P)))
    logits = logits.reshape(N, C, r0, LANES)
    gt = gt.reshape(N, r0, LANES)

    # Byte-budgeted row tile (multiple of 8), aware of C and input dtypes.
    row_bytes = (C * LANES * jnp.dtype(y_pred.dtype).itemsize
                 + LANES * jnp.dtype(y_gt.dtype).itemsize)
    tr = max(8, (BLOCK_BYTE_BUDGET // row_bytes) // 8 * 8)
    tr = min(tr, ((r0 + 7) // 8) * 8)
    R = (r0 + tr - 1) // tr                # partial last tile handled in-kernel

    kernel = functools.partial(_fscore_kernel, total_rows=r0)
    parts = pl.pallas_call(
        kernel,
        out_shape=jax.ShapeDtypeStruct((N, R, 3, 8, LANES), jnp.float32),
        grid=(N, R),
        in_specs=[
            pl.BlockSpec((1, C, tr, LANES), lambda n, r: (n, 0, r, 0)),
            pl.BlockSpec((1, tr, LANES), lambda n, r: (n, r, 0)),
        ],
        out_specs=pl.BlockSpec((1, 1, 3, 8, LANES),
                               lambda n, r: (n, r, 0, 0, 0)),
        compiler_params=pltpu.CompilerParams(
            # No state is carried across grid steps (each step writes its own
            # partials block), so both axes are "parallel" -> v7x megacore can
            # split the stream across both TensorCores.
            dimension_semantics=("parallel", "parallel"),
            vmem_limit_bytes=32 * 1024 * 1024,
        ),
    )(logits, gt)

    # Tiny epilogue in plain JAX: reduce the (N, R, 3, 8, 128) partials and
    # apply the f1 formula (tn is never needed).
    sums = jnp.sum(parts, axis=(0, 1, 3, 4))        # (3,)
    tp, sum_pred, sum_gt = sums[0], sums[1], sums[2]
    fp = sum_pred - tp
    fn = sum_gt - tp
    eps = jnp.float32(1e-07)
    precision = tp / (tp + fp + eps)
    recall = tp / (tp + fn + eps)
    return 2.0 * (precision * recall) / (precision + recall + eps)


def _fscore_ref(y_pred, y_gt):
    probs = jax.nn.softmax(y_pred.astype(jnp.float32), axis=1)
    pred = jnp.argmax(probs, axis=1).astype(jnp.float32)
    gt = y_gt.astype(jnp.float32)
    tp = jnp.sum(gt * pred)
    fp = jnp.sum((1.0 - gt) * pred)
    fn = jnp.sum(gt * (1.0 - pred))
    eps = 1e-07
    precision = tp / (tp + fp + eps)
    recall = tp / (tp + fn + eps)
    return 2.0 * (precision * recall) / (precision + recall + eps)


if __name__ == "__main__":
    key = jax.random.PRNGKey(0)
    k1, k2, k3, k4, k5, k6 = jax.random.split(key, 6)

    # main case: batch=2, channels=4, 16x16 (H*W multiple of 128, ragged row tile)
    N, C, H, W = 2, 4, 16, 16
    y_pred = jax.random.normal(k1, (N, C, H, W), dtype=jnp.float32)
    y_gt = jax.random.bernoulli(k2, 0.5, (N, H, W)).astype(jnp.int32)
    f1 = jax.block_until_ready(fscore(y_pred, y_gt))
    f1_ref = jax.block_until_ready(_fscore_ref(y_pred, y_gt))
    assert jnp.allclose(f1, f1_ref, atol=1e-5, rtol=1e-5), (f1, f1_ref)

    # padded / binary case: H*W not a multiple of 128, C=2
    N2, C2, H2, W2 = 2, 2, 10, 10
    y_pred2 = jax.random.normal(k3, (N2, C2, H2, W2), dtype=jnp.float32)
    y_gt2 = jax.random.bernoulli(k4, 0.5, (N2, H2, W2)).astype(jnp.int32)
    f1b = jax.block_until_ready(fscore(y_pred2, y_gt2))
    f1b_ref = jax.block_until_ready(_fscore_ref(y_pred2, y_gt2))
    assert jnp.allclose(f1b, f1b_ref, atol=1e-5, rtol=1e-5), (f1b, f1b_ref)

    # tie-break case: integer-valued logits force frequent cross-channel ties;
    # strict '>' must resolve to the lowest channel, matching jnp.argmax.
    N3, C3, H3, W3 = 1, 3, 16, 16
    y_pred3 = jnp.round(jax.random.normal(k5, (N3, C3, H3, W3), dtype=jnp.float32))
    y_gt3 = jax.random.bernoulli(k6, 0.5, (N3, H3, W3)).astype(jnp.int32)
    f1c = jax.block_until_ready(fscore(y_pred3, y_gt3))
    f1c_ref = jax.block_until_ready(_fscore_ref(y_pred3, y_gt3))
    assert jnp.allclose(f1c, f1c_ref, atol=1e-5, rtol=1e-5), (f1c, f1c_ref)

    print("KERNEL_OK")
</pallas_src>

<mosaic_0001>
module attributes {stable_mosaic.version = 11 : i64} {
  func.func @_fscore_kernel(%arg0: i32, %arg1: i32, %arg2: memref<1x4x8x128xf32, #tpu.memory_space<vmem>>, %arg3: memref<1x8x128xi32, #tpu.memory_space<vmem>>, %arg4: memref<1x1x3x8x128xf32, #tpu.memory_space<vmem>>) attributes {dimension_semantics = [#tpu.dimension_semantics<parallel>, #tpu.dimension_semantics<parallel>], iteration_bounds = array<i64: 2, 1>, scalar_prefetch = 0 : i64, scratch_operands = 0 : i64, tpu.core_type = #tpu.core_type<tc>, window_params = [{transform_indices = @transform_0, window_bounds = array<i64: 1, 4, 8, 128>}, {transform_indices = @transform_1, window_bounds = array<i64: 1, 8, 128>}, {transform_indices = @transform_2, window_bounds = array<i64: 1, 1, 3, 8, 128>}]} {
    %c0 = arith.constant 0 : index
    %c0_0 = arith.constant 0 : index
    %c0_1 = arith.constant 0 : index
    %c0_2 = arith.constant 0 : index
    %0 = vector.load %arg2[%c0, %c0_0, %c0_1, %c0_2] : memref<1x4x8x128xf32, #tpu.memory_space<vmem>>, vector<1x1x8x128xf32>
    %1 = vector.shape_cast %0 : vector<1x1x8x128xf32> to vector<8x128xf32>
    %cst = arith.constant 0.000000e+00 : f32
    %2 = vector.broadcast %cst : f32 to vector<8x128xf32>
    %c0_3 = arith.constant 0 : index
    %c1 = arith.constant 1 : index
    %c0_4 = arith.constant 0 : index
    %c0_5 = arith.constant 0 : index
    %3 = vector.load %arg2[%c0_3, %c1, %c0_4, %c0_5] : memref<1x4x8x128xf32, #tpu.memory_space<vmem>>, vector<1x1x8x128xf32>
    %4 = vector.shape_cast %3 : vector<1x1x8x128xf32> to vector<8x128xf32>
    %5 = arith.cmpf ogt, %4, %1 : vector<8x128xf32>
    %6 = arith.select %5, %4, %1 : vector<8x128xi1>, vector<8x128xf32>
    %cst_6 = arith.constant 1.000000e+00 : f32
    %7 = vector.broadcast %cst_6 : f32 to vector<8x128xf32>
    %8 = arith.select %5, %7, %2 : vector<8x128xi1>, vector<8x128xf32>
    %c0_7 = arith.constant 0 : index
    %c2 = arith.constant 2 : index
    %c0_8 = arith.constant 0 : index
    %c0_9 = arith.constant 0 : index
    %9 = vector.load %arg2[%c0_7, %c2, %c0_8, %c0_9] : memref<1x4x8x128xf32, #tpu.memory_space<vmem>>, vector<1x1x8x128xf32>
    %10 = vector.shape_cast %9 : vector<1x1x8x128xf32> to vector<8x128xf32>
    %11 = arith.cmpf ogt, %10, %6 : vector<8x128xf32>
    %12 = arith.select %11, %10, %6 : vector<8x128xi1>, vector<8x128xf32>
    %cst_10 = arith.constant 2.000000e+00 : f32
    %13 = vector.broadcast %cst_10 : f32 to vector<8x128xf32>
    %14 = arith.select %11, %13, %8 : vector<8x128xi1>, vector<8x128xf32>
    %c0_11 = arith.constant 0 : index
    %c3 = arith.constant 3 : index
    %c0_12 = arith.constant 0 : index
    %c0_13 = arith.constant 0 : index
    %15 = vector.load %arg2[%c0_11, %c3, %c0_12, %c0_13] : memref<1x4x8x128xf32, #tpu.memory_space<vmem>>, vector<1x1x8x128xf32>
    %16 = vector.shape_cast %15 : vector<1x1x8x128xf32> to vector<8x128xf32>
    %17 = arith.cmpf ogt, %16, %12 : vector<8x128xf32>
    %cst_14 = arith.constant 3.000000e+00 : f32
    %18 = vector.broadcast %cst_14 : f32 to vector<8x128xf32>
    %19 = arith.select %17, %18, %14 : vector<8x128xi1>, vector<8x128xf32>
    %c0_15 = arith.constant 0 : index
    %c0_16 = arith.constant 0 : index
    %c0_17 = arith.constant 0 : index
    %20 = vector.load %arg3[%c0_15, %c0_16, %c0_17] : memref<1x8x128xi32, #tpu.memory_space<vmem>>, vector<1x8x128xi32>
    %21 = vector.shape_cast %20 : vector<1x8x128xi32> to vector<8x128xi32>
    %22 = arith.sitofp %21 : vector<8x128xi32> to vector<8x128xf32>
    %23 = tpu.iota {dimensions = array<i32: 0>} : vector<8x128xi32>
    %c8_i32 = arith.constant 8 : i32
    %24 = arith.muli %arg1, %c8_i32 : i32
    %c2_i32 = arith.constant 2 : i32
    %25 = arith.subi %c2_i32, %24 : i32
    %26 = vector.broadcast %25 : i32 to vector<8x128xi32>
    %27 = arith.cmpi slt, %23, %26 : vector<8x128xi32>
    %cst_18 = arith.constant 0.000000e+00 : f32
    %28 = vector.broadcast %cst_18 : f32 to vector<8x128xf32>
    %29 = arith.select %27, %19, %28 : vector<8x128xi1>, vector<8x128xf32>
    %cst_19 = arith.constant 0.000000e+00 : f32
    %30 = vector.broadcast %cst_19 : f32 to vector<8x128xf32>
    %31 = arith.select %27, %22, %30 : vector<8x128xi1>, vector<8x128xf32>
    %32 = arith.mulf %31, %29 : vector<8x128xf32>
    %33 = vector.shape_cast %32 : vector<8x128xf32> to vector<1x8x128xf32>
    %cst_20 = arith.constant dense<0.000000e+00> : vector<8x128xf32>
    %34 = vector.multi_reduction <add>, %33, %cst_20 [0] : vector<1x8x128xf32> to vector<8x128xf32>
    %c0_21 = arith.constant 0 : index
    %c0_22 = arith.constant 0 : index
    %c0_23 = arith.constant 0 : index
    %c0_24 = arith.constant 0 : index
    %c0_25 = arith.constant 0 : index
    %35 = vector.load %arg4[%c0_21, %c0_22, %c0_23, %c0_24, %c0_25] : memref<1x1x3x8x128xf32, #tpu.memory_space<vmem>>, vector<1x1x1x8x128xf32>
    %36 = vector.shape_cast %35 : vector<1x1x1x8x128xf32> to vector<8x128xf32>
    %37 = vector.shape_cast %34 : vector<8x128xf32> to vector<1x1x1x8x128xf32>
    tpu.vector_store %arg4[%c0_21, %c0_22, %c0_23, %c0_24, %c0_25], %37 {strides = array<i32>} : memref<1x1x3x8x128xf32, #tpu.memory_space<vmem>>, vector<1x1x1x8x128xf32>,
    %38 = vector.shape_cast %29 : vector<8x128xf32> to vector<1x8x128xf32>
    %cst_26 = arith.constant dense<0.000000e+00> : vector<8x128xf32>
    %39 = vector.multi_reduction <add>, %38, %cst_26 [0] : vector<1x8x128xf32> to vector<8x128xf32>
    %c0_27 = arith.constant 0 : index
    %c0_28 = arith.constant 0 : index
    %c1_29 = arith.constant 1 : index
    %c0_30 = arith.constant 0 : index
    %c0_31 = arith.constant 0 : index
    %40 = vector.load %arg4[%c0_27, %c0_28, %c1_29, %c0_30, %c0_31] : memref<1x1x3x8x128xf32, #tpu.memory_space<vmem>>, vector<1x1x1x8x128xf32>
    %41 = vector.shape_cast %40 : vector<1x1x1x8x128xf32> to vector<8x128xf32>
    %42 = vector.shape_cast %39 : vector<8x128xf32> to vector<1x1x1x8x128xf32>
    tpu.vector_store %arg4[%c0_27, %c0_28, %c1_29, %c0_30, %c0_31], %42 {strides = array<i32>} : memref<1x1x3x8x128xf32, #tpu.memory_space<vmem>>, vector<1x1x1x8x128xf32>,
    %43 = vector.shape_cast %31 : vector<8x128xf32> to vector<1x8x128xf32>
    %cst_32 = arith.constant dense<0.000000e+00> : vector<8x128xf32>
    %44 = vector.multi_reduction <add>, %43, %cst_32 [0] : vector<1x8x128xf32> to vector<8x128xf32>
    %c0_33 = arith.constant 0 : index
    %c0_34 = arith.constant 0 : index
    %c2_35 = arith.constant 2 : index
    %c0_36 = arith.constant 0 : index
    %c0_37 = arith.constant 0 : index
    %45 = vector.load %arg4[%c0_33, %c0_34, %c2_35, %c0_36, %c0_37] : memref<1x1x3x8x128xf32, #tpu.memory_space<vmem>>, vector<1x1x1x8x128xf32>
    %46 = vector.shape_cast %45 : vector<1x1x1x8x128xf32> to vector<8x128xf32>
    %47 = vector.shape_cast %44 : vector<8x128xf32> to vector<1x1x1x8x128xf32>
    tpu.vector_store %arg4[%c0_33, %c0_34, %c2_35, %c0_36, %c0_37], %47 {strides = array<i32>} : memref<1x1x3x8x128xf32, #tpu.memory_space<vmem>>, vector<1x1x1x8x128xf32>,
    return
  }
  func.func @transform_0(%arg0: i32, %arg1: i32) -> (i32, i32, i32, i32) {
    %c0_i32 = arith.constant 0 : i32
    %c0_i32_0 = arith.constant 0 : i32
    %c0_i32_1 = arith.constant 0 : i32
    return %arg0, %c0_i32, %arg1, %c0_i32_0 : i32, i32, i32, i32
  }
  func.func @transform_1(%arg0: i32, %arg1: i32) -> (i32, i32, i32) {
    %c0_i32 = arith.constant 0 : i32
    %c0_i32_0 = arith.constant 0 : i32
    return %arg0, %arg1, %c0_i32 : i32, i32, i32
  }
  func.func @transform_2(%arg0: i32, %arg1: i32) -> (i32, i32, i32, i32, i32) {
    %c0_i32 = arith.constant 0 : i32
    %c0_i32_0 = arith.constant 0 : i32
    %c0_i32_1 = arith.constant 0 : i32
    %c0_i32_2 = arith.constant 0 : i32
    return %arg0, %arg1, %c0_i32, %c0_i32_0, %c0_i32_1 : i32, i32, i32, i32, i32
  }
}

</mosaic_0001>

<llo_original>
// kernel: tpu_custom_call.1
$region0: #{tpu_custom_call.1}
  #allocation0 [shape = 'u32[]', space=smem, size = 0x4, offset = 0x4, fixed_abs, tag = 'smem constant byte address 0x4 - core index']
  #allocation1 [shape = 'u32[72,128]{1,0:T(1,128)}', space=vmem, size = 0x9000, scoped, tag = 'internal scratch']
  #allocation8 [shape = 's32[]', space=sflag, size = 0x4, offset = 0, fixed_abs, tag = 'sflag constant byte address 0x0 - dummy sync flag']
  %s0 = inlined_call_operand.hbm [shape: f32[2,4,2,128], index: 0, kind: input, shape index: {}]
  %s1 = inlined_call_operand.hbm [shape: s32[2,2,128], index: 1, kind: input, shape index: {}]
  %s2 = inlined_call_operand.hbm [shape: f32[2,1,3,8,128], index: 2, kind: output, shape index: {}]
  %s3 = sld [smem:[#allocation0]]
  $region49: #{tpu_custom_call.1} parent=0
    _
  %s5 = ssub.s32 1, %s3
  %s6 = scalar_select 0, %s5, %s3
  $region1: #{tpu_custom_call.1} parent=0
    #allocation2 [shape = 'u8[32768]{0}', space=vmem, size = 0x8000, scoped, tag = 'input window, operand 0']
    #allocation3 [shape = 's32[2]{0}', space=sflag, size = 0x8, scoped, tag = 'scoped memory for tpu_custom_call.1']
    #allocation4 [shape = 's32[2]{0}', space=sflag, size = 0x8, scoped, tag = 'scoped memory for tpu_custom_call.1']
    #allocation5 [shape = 'u8[8192]{0}', space=vmem, size = 0x2000, scoped, tag = 'input window, operand 1']
    #allocation6 [shape = 's32[2]{0}', space=sflag, size = 0x8, scoped, tag = 'scoped memory for tpu_custom_call.1']
    #allocation7 [shape = 'u8[24576]{0}', space=vmem, size = 0x6000, scoped, tag = 'output window, operand 0']
    %7 = vsyncpa [#allocation3], 0
    %s8 = scalar_lea.sflag [#allocation3], 1
    %9 = vsyncpa %s8, 0
    %10 = vsyncpa [#allocation6], 0
    %s11 = scalar_lea.sflag [#allocation6], 1
    %12 = vsyncpa %s11, 0
    %13 = vsyncpa [#allocation4], 0
    %s14 = scalar_lea.sflag [#allocation4], 1
    %15 = vsyncpa %s14, 0
    loop: start=0, step=1, limit=4
    $region2: #{tpu_custom_call.1} parent=1 // loop_pre_header
      _
    $region3: #{tpu_custom_call.1} parent=1 // loop_header
      %s17 = sphi 0, %s21
      %p18 = scmp.ge.s32.totalorder %s17, 4
      %s24 = sphi 0, %s36
      %s25 = sphi 0, %s32
      %s26 = sphi 0, %s24
      %s27 = sphi 0, %s25
      %s28 = sphi 0, %s26
      %s29 = sphi 0, %s27
      %s41 = sphi 0, %s43
      %s44 = sphi 0, %s41
      %s45 = sphi 0, %s44
      %s61 = sphi 0, %s45
      %s69 = sphi 0, %s71
      %s72 = sphi 0, %s69
      %s73 = sphi 0, %s72
      %s89 = sphi 0, %s73
      %s97 = sphi 0, %s99
      %s100 = sphi 0, %s97
      %s101 = sphi 0, %s100
      %s117 = sphi 0, %s101
    $region4: #{tpu_custom_call.1} parent=1 // loop_header_branch
      %20 = sbr.rel (%p18) target = $region8
    $region5: #{tpu_custom_call.1} parent=1 // loop_body
      %s22 = ssub.s32 %s17, 1
      %s23 = ssub.s32 %s17, 2
      %s30 = sadd.s32 1, %s25
      %p31 = scmp.ge.s32.totalorder %s30, 1
      %s32 = scalar_select %p31, 0, %s30
      %s33 = sadd.s32 1, %s24
      %s34 = scalar_select %p31, %s33, %s24
      %p35 = scmp.ge.s32.totalorder %s34, 2
      %s36 = scalar_select %p35, 0, %s34
      %s37 = ssub.s32 %s24, %s36
      %s38 = ssub.s32 %s25, %s32
      %s39 = sor.u32 %s37, %s38
      %p40 = scmp.eq.s32.totalorder %s39, 0
      %s42 = sadd.s32 %s41, 1
      %s43 = scalar_select %p40, %s41, %s42
      %p46 = pneg %p40
      %p47 = scmp.eq.s32.totalorder %s17, 1
      %p48 = por %p46, %p47
      %p49 = scmp.ne.s32.totalorder %s41, %s44
      %p50 = scmp.eq.s32.totalorder %s17, 0
      %p51 = por %p49, %p50
      %p52 = scmp.ne.s32.totalorder %s41, %s44
      %p53 = scmp.eq.s32.totalorder %s22, 1
      %p54 = por %p52, %p53
      %p55 = scmp.ne.s32.totalorder %s44, %s45
      %p56 = scmp.eq.s32.totalorder %s22, 0
      %p57 = por %p55, %p56
      %p58 = scmp.ne.s32.totalorder %s44, %s45
      %p59 = scmp.eq.s32.totalorder %s23, 1
      %p60 = por %p58, %p59
      %p62 = scmp.ne.s32.totalorder %s45, %s61
      %p63 = scmp.eq.s32.totalorder %s23, 0
      %p64 = por %p62, %p63
      %s65 = ssub.s32 %s24, %s36
      %s66 = ssub.s32 %s25, %s32
      %s67 = sor.u32 %s65, %s66
      %p68 = scmp.eq.s32.totalorder %s67, 0
      %s70 = sadd.s32 %s69, 1
      %s71 = scalar_select %p68, %s69, %s70
      %p74 = pneg %p68
      %p75 = scmp.eq.s32.totalorder %s17, 1
      %p76 = por %p74, %p75
      %p77 = scmp.ne.s32.totalorder %s69, %s72
      %p78 = scmp.eq.s32.totalorder %s17, 0
      %p79 = por %p77, %p78
      %p80 = scmp.ne.s32.totalorder %s69, %s72
      %p81 = scmp.eq.s32.totalorder %s22, 1
      %p82 = por %p80, %p81
      %p83 = scmp.ne.s32.totalorder %s72, %s73
      %p84 = scmp.eq.s32.totalorder %s22, 0
      %p85 = por %p83, %p84
      %p86 = scmp.ne.s32.totalorder %s72, %s73
      %p87 = scmp.eq.s32.totalorder %s23, 1
      %p88 = por %p86, %p87
      %p90 = scmp.ne.s32.totalorder %s73, %s89
      %p91 = scmp.eq.s32.totalorder %s23, 0
      %p92 = por %p90, %p91
      %s93 = ssub.s32 %s24, %s36
      %s94 = ssub.s32 %s25, %s32
      %s95 = sor.u32 %s93, %s94
      %p96 = scmp.eq.s32.totalorder %s95, 0
      %s98 = sadd.s32 %s97, 1
      %s99 = scalar_select %p96, %s97, %s98
      %p102 = pneg %p96
      %p103 = scmp.eq.s32.totalorder %s17, 1
      %p104 = por %p102, %p103
      %p105 = scmp.ne.s32.totalorder %s97, %s100
      %p106 = scmp.eq.s32.totalorder %s17, 0
      %p107 = por %p105, %p106
      %p108 = scmp.ne.s32.totalorder %s97, %s100
      %p109 = scmp.eq.s32.totalorder %s22, 1
      %p110 = por %p108, %p109
      %p111 = scmp.ne.s32.totalorder %s100, %s101
      %p112 = scmp.eq.s32.totalorder %s22, 0
      %p113 = por %p111, %p112
      %p114 = scmp.ne.s32.totalorder %s100, %s101
      %p115 = scmp.eq.s32.totalorder %s23, 1
      %p116 = por %p114, %p115
      %p118 = scmp.ne.s32.totalorder %s101, %s117
      %p119 = scmp.eq.s32.totalorder %s23, 0
      %p120 = por %p118, %p119
      %p121 = scmp.le.s32.totalorder 1, %s17
      %p122 = scmp.lt.s32.totalorder %s17, 3
      %p123 = pnand %p121, %p122
      %p124 = pneg %p123
      // Predicated region
      $region9: #{tpu_custom_call.1} parent=5 // pred_check
        _
      $region10: #{tpu_custom_call.1} parent=5 // pred_check_branch
        %126 = sbr.rel (%p123) target = $region12
      $region11: #{tpu_custom_call.1} parent=5 // pred_region
        %s127 = ssub.s32 %s17, 1
      $region12: #{tpu_custom_call.1} parent=5 // pred_fallthru
        _
      %p128 = scmp.lt.s32.totalorder %s17, 2
      // Predicated region
      $region13: #{tpu_custom_call.1} parent=5 // pred_check
        %p129 = pneg %p128
      $region14: #{tpu_custom_call.1} parent=5 // pred_check_branch
        %131 = sbr.rel (%p129) target = $region16
      $region15: #{tpu_custom_call.1} parent=5 // pred_region
        // Predicated region
        $region17: #{tpu_custom_call.1} parent=15 // pred_check
          %p132 = pneg %p51
        $region18: #{tpu_custom_call.1} parent=15 // pred_check_branch
          %134 = sbr.rel (%p132) target = $region20
        $region19: #{tpu_custom_call.1} parent=15 // pred_region
          #allocation9 [shape = 'u32[6]{0}', space=smem, size = 0x18, scoped, tag = 'DMA stride descriptor']
          %s135 = sand.u32 %s41, 1
          %s136 = scalar_lea.sflag [#allocation3], %s135
          %s137 = sand.u32 %s41, 1
          %s138 = smul.addr %s137, 32
          %s139 = scalar_lea.vmem [#allocation2], %s138
          %s140 = smul.u32 4, %s25
          %s141 = ssub.s32 1, %s140
          %s142 = smul.u32 8, %s141
          %s143 = ssub.s32 32, %s142
          %s144 = sshll.u32 %s143, 4
          %145 = vsyncadd %s136, %s144
          %p146 = scmp.ne.s32.totalorder 0, %s142
          %s147 = smul.addr %s24, 4
          %s148 = sadd.s32 %s140, %s147
          %s149 = smul.addr %s148, 2
          %s150 = scalar_lea.hbm %s0, %s149
          %s151 = smul.u32 2, %s141
          %s152 = smul.u32 %s151, 4
          %s154 = sshll.u32 1, 14
          %s155 = sxor.u32 4294967295, %s154
          %s157 = sld [smem:[#allocation0]]
          %s158 = sadd.s32 2, %s157
          %s160 = sshll.u32 7, 26
          %s161 = sxor.u32 4294967295, %s160
          %s162 = sand.u32 0, %s161
          %s163 = sshll.u32 %s158, 26
          %s164 = sor.u32 %s162, %s163
          %s165 = sshll.u32 %s150, 4
          %s166 = int_to_ptr.hbm [resolvable:$true] %s165
          %s167 = sshll.u32 %s139, 4
          %s168 = int_to_ptr.vmem [resolvable:$true] %s167
          %s169 = sshll.u32 %s152, 4
          %174 = sst [smem:[#allocation9]] 32
          %s175 = scalar_lea.smem [#allocation9], 1
          %176 = sst [smem:[%s175]] 128
          %s177 = scalar_lea.smem [#allocation9], 2
          %178 = sst [smem:[%s177]] %s141
          %s179 = scalar_lea.smem [#allocation9], 3
          %180 = sst [smem:[%s179]] 32
          %s181 = scalar_lea.smem [#allocation9], 4
          %182 = sst [smem:[%s181]] 32
          %s183 = scalar_lea.smem [#allocation9], 5
          %184 = sst [smem:[%s183]] 2
          %186 = dma.general (%p146), %s166, %s169, %s168, %s136, [#allocation8], [#allocation9], %s164, 0
        $region20: #{tpu_custom_call.1} parent=15 // pred_fallthru
          _
        // Predicated region
        $region21: #{tpu_custom_call.1} parent=15 // pred_check
          %p187 = pneg %p79
        $region22: #{tpu_custom_call.1} parent=15 // pred_check_branch
          %189 = sbr.rel (%p187) target = $region24
        $region23: #{tpu_custom_call.1} parent=15 // pred_region
          %s190 = sand.u32 %s69, 1
          %s191 = scalar_lea.sflag [#allocation6], %s190
          %s192 = sand.u32 %s69, 1
          %s193 = smul.addr %s192, 8
          %s194 = scalar_lea.vmem [#allocation5], %s193
          %s195 = smul.u32 4, %s25
          %s196 = ssub.s32 1, %s195
          %s197 = smul.u32 2, %s196
          %s198 = ssub.s32 8, %s197
          %s199 = sshll.u32 %s198, 4
          %200 = vsyncadd %s191, %s199
          %p201 = scmp.ne.s32.totalorder 0, %s197
          %s202 = sadd.s32 %s195, %s24
          %s203 = smul.addr %s202, 2
          %s204 = scalar_lea.hbm %s1, %s203
          %s205 = smul.u32 2, %s196
          %s206 = sshll.u32 %s204, 4
          %s207 = int_to_ptr.hbm [resolvable:$true] %s206
          %s208 = sshll.u32 %s194, 4
          %s209 = int_to_ptr.vmem [resolvable:$true] %s208
          %s210 = sshll.u32 %s205, 4
          %214 = dma.hbm_to_vmem [thread:$0]  (%p201), %s207, %s210, %s209, %s191, 32, 32, 2
        $region24: #{tpu_custom_call.1} parent=15 // pred_fallthru
          _
      $region16: #{tpu_custom_call.1} parent=5 // pred_fallthru
        _
      %p215 = scmp.le.s32.totalorder 1, %s17
      %p216 = scmp.lt.s32.totalorder %s17, 3
      %p217 = pnand %p215, %p216
      %p218 = pneg %p217
      // Predicated region
      $region25: #{tpu_custom_call.1} parent=5 // pred_check
        _
      $region26: #{tpu_custom_call.1} parent=5 // pred_check_branch
        %220 = sbr.rel (%p217) target = $region28
      $region27: #{tpu_custom_call.1} parent=5 // pred_region
        %s221 = ssub.s32 %s17, 1
        %s222 = sand.u32 %s44, 1
        %s223 = scalar_lea.sflag [#allocation3], %s222
        %s224 = sand.u32 %s44, 1
        %s225 = smul.addr %s224, 32
        %s226 = scalar_lea.vmem [#allocation2], %s225
        // Predicated region
        $region29: #{tpu_custom_call.1} parent=27 // pred_check
          %p227 = pneg %p57
        $region30: #{tpu_custom_call.1} parent=27 // pred_check_branch
          %229 = sbr.rel (%p227) target = $region32
        $region31: #{tpu_custom_call.1} parent=27 // pred_region
          %231 = dma.done %s223, 512
        $region32: #{tpu_custom_call.1} parent=27 // pred_fallthru
          _
        %s232 = sand.u32 %s72, 1
        %s233 = scalar_lea.sflag [#allocation6], %s232
        %s234 = sand.u32 %s72, 1
        %s235 = smul.addr %s234, 8
        %s236 = scalar_lea.vmem [#allocation5], %s235
        // Predicated region
        $region33: #{tpu_custom_call.1} parent=27 // pred_check
          %p237 = pneg %p85
        $region34: #{tpu_custom_call.1} parent=27 // pred_check_branch
          %239 = sbr.rel (%p237) target = $region36
        $region35: #{tpu_custom_call.1} parent=27 // pred_region
          %241 = dma.done %s233, 128
        $region36: #{tpu_custom_call.1} parent=27 // pred_fallthru
          _
        %s242 = sand.u32 %s44, 1
        %s243 = scalar_lea.sflag [#allocation3], %s242
        %s244 = sand.u32 %s44, 1
        %s245 = smul.addr %s244, 32
        %s246 = scalar_lea.vmem [#allocation2], %s245
        %p247 = pneg %p57
        %p248 = pneg %p54
        %s249 = sand.u32 %s72, 1
        %s250 = scalar_lea.sflag [#allocation6], %s249
        %s251 = sand.u32 %s72, 1
        %s252 = smul.addr %s251, 8
        %s253 = scalar_lea.vmem [#allocation5], %s252
        %p254 = pneg %p85
        %p255 = pneg %p82
        %p256 = pneg %p113
        %p257 = pneg %p110
        %s258 = sand.u32 %s100, 1
        %s259 = scalar_lea.sflag [#allocation4], %s258
        %s260 = sand.u32 %s100, 1
        %s261 = smul.addr %s260, 24
        %s262 = scalar_lea.vmem [#allocation7], %s261
        %s263 = smul.u32 4, %s27
        %s264 = ssub.s32 1, %s263
        %s265 = smul.u32 8, %s264
        %s266 = smul.u32 4, %s27
        %s267 = ssub.s32 1, %s266
        %s268 = smul.u32 2, %s267
        %v269 = vld [vmem:[%s226] sm:$0xff]
        %s270 = scalar_lea.vmem %s226, 8 [#allocation2]
        %v271 = vld [vmem:[%s270] sm:$0xff]
        %vm272 = vcmp.gt.f32.partialorder %v271, %v269
        %v273 = vsel %vm272, %v271, %v269
        %v274 = vsel %vm272, 1.0, 0.0
        %s275 = scalar_lea.vmem %s226, 16 [#allocation2]
        %v276 = vld [vmem:[%s275] sm:$0xff]
        %vm277 = vcmp.gt.f32.partialorder %v276, %v273
        %v278 = vsel %vm277, %v276, %v273
        %v279 = vsel %vm277, 2.0, %v274
        %s280 = scalar_lea.vmem %s226, 24 [#allocation2]
        %v281 = vld [vmem:[%s280] sm:$0xff]
        %vm282 = vcmp.gt.f32.partialorder %v281, %v278
        %v283 = vsel %vm282, 3.0, %v279
        %v284 = vld [vmem:[%s236] sm:$0xff]
        %v285 = vcvt.s32.f32 %v284
        %v286 = vlaneseq
        %v287 = vshrl.u32 %v286, 7
        %s288 = smul.u32 %s27, 8
        %s289 = ssub.s32 2, %s288
        %v290 = vstv %s289
        %vm291 = vcmp.lt.s32.totalorder %v287, %v290
        %v292 = vsel %vm291, %v283, 0.0
        %v293 = vsel %vm291, %v285, 0.0
        %v294 = vmul.f32 %v293, %v292
        %v295 = vadd.f32 %v294, 0.0
        %296 = vst [vmem:[%s262] sm:$0xff] %v295
        %v297 = vadd.f32 %v292, 0.0
        %s298 = scalar_lea.vmem %s262, 8 [#allocation7]
        %299 = vst [vmem:[%s298] sm:$0xff] %v297
        %v300 = vadd.f32 %v293, 0.0
        %s301 = scalar_lea.vmem %s262, 16 [#allocation7]
        %302 = vst [vmem:[%s301] sm:$0xff] %v300
        %s303 = sand.u32 %s100, 1
        %s304 = scalar_lea.sflag [#allocation4], %s303
        %s305 = sand.u32 %s100, 1
        %s306 = smul.addr %s305, 24
        %s307 = scalar_lea.vmem [#allocation7], %s306
        // Predicated region
        $region37: #{tpu_custom_call.1} parent=27 // pred_check
          %p308 = pneg %p110
        $region38: #{tpu_custom_call.1} parent=27 // pred_check_branch
          %310 = sbr.rel (%p308) target = $region40
        $region39: #{tpu_custom_call.1} parent=27 // pred_region
          %312 = vsyncadd %s304, 0
          %s313 = smul.addr %s27, 3
          %s314 = smul.addr %s26, 3
          %s315 = sadd.s32 %s313, %s314
          %s316 = smul.addr %s315, 8
          %s317 = scalar_lea.hbm %s2, %s316
          %s318 = sshll.u32 %s307, 4
          %s319 = int_to_ptr.vmem [resolvable:$true] %s318
          %s320 = sshll.u32 %s317, 4
          %s321 = int_to_ptr.hbm [resolvable:$true] %s320
          %326 = dma.vmem_to_hbm [thread:$0]  %s319, 384, %s321, %s304, 128, 128, 8
        $region40: #{tpu_custom_call.1} parent=27 // pred_fallthru
          _
      $region28: #{tpu_custom_call.1} parent=5 // pred_fallthru
        _
      %p327 = scmp.le.s32.totalorder 2, %s17
      // Predicated region
      $region41: #{tpu_custom_call.1} parent=5 // pred_check
        %p328 = pneg %p327
      $region42: #{tpu_custom_call.1} parent=5 // pred_check_branch
        %330 = sbr.rel (%p328) target = $region44
      $region43: #{tpu_custom_call.1} parent=5 // pred_region
        %s331 = ssub.s32 %s17, 2
        // Predicated region
        $region45: #{tpu_custom_call.1} parent=43 // pred_check
          %p332 = pneg %p116
        $region46: #{tpu_custom_call.1} parent=43 // pred_check_branch
          %334 = sbr.rel (%p332) target = $region48
        $region47: #{tpu_custom_call.1} parent=43 // pred_region
          %s335 = sand.u32 %s101, 1
          %s336 = scalar_lea.sflag [#allocation4], %s335
          %s337 = sand.u32 %s101, 1
          %s338 = smul.addr %s337, 24
          %s339 = scalar_lea.vmem [#allocation7], %s338
          %341 = dma.done %s336, 384
        $region48: #{tpu_custom_call.1} parent=43 // pred_fallthru
          _
      $region44: #{tpu_custom_call.1} parent=5 // pred_fallthru
        _
    $region6: #{tpu_custom_call.1} parent=1 // loop_footer
      %s21 = sadd.s32 1, %s17
    $region7: #{tpu_custom_call.1} parent=1 // loop_footer_branch
      %16 = sbr.rel target = $region3
    $region8: #{tpu_custom_call.1} parent=1 // loop_exit
      _
    %342 = vsyncpa [#allocation3], 1
    %s343 = scalar_lea.sflag [#allocation3], 1
    %344 = vsyncpa %s343, 1
    %345 = vsyncpa [#allocation6], 1
    %s346 = scalar_lea.sflag [#allocation6], 1
    %347 = vsyncpa %s346, 1
    %348 = vsyncpa [#allocation4], 1
    %s349 = scalar_lea.sflag [#allocation4], 1
    %350 = vsyncpa %s349, 1

</llo_original>
